<compile_context>
chip_gen: v6e
topology: v6e:2x2x1
jax: 0.10.0
libtpu: 0.0.40
codegen_flags: <defaults>
</compile_context>

<pallas_src>
import math

import jax
import jax.numpy as jnp
from jax.experimental import pallas as pl
from jax.experimental.pallas import tpu as pltpu


def _segment_embedding_kernel(seg_ref, table_ref, out_ref):
    # seg_ref:   (TILE_R, FOLD)     int32  -- FOLD token ids per packed output row
    # table_ref: (3, FOLD*E)        float  -- embedding table tiled FOLD times along lanes
    # out_ref:   (TILE_R, FOLD*E)   float  -- packed gathered embeddings
    tile_r, fold = seg_ref.shape
    e_packed = out_ref.shape[-1]

    t0 = table_ref[0:1, :]  # (1, FOLD*E)
    t1 = table_ref[1:2, :]
    t2 = table_ref[2:3, :]

    if fold == 1:
        # Narrow masks: (tile_r, 1) compares; the two selects broadcast the mask
        # across lanes.  ~2 full-width vreg ops per output vreg (plus the store).
        seg = seg_ref[...]                                   # (tile_r, 1)
        out = jnp.where(seg == 0, t0, jnp.where(seg == 1, t1, t2))
    else:
        # Packed path (E not a multiple of 128): lanes [j*E, (j+1)*E) carry the
        # id of token slot j.
        e = e_packed // fold
        lane = jax.lax.broadcasted_iota(jnp.int32, (tile_r, e_packed), 1)
        seg_per_lane = jnp.broadcast_to(seg_ref[:, 0:1], (tile_r, e_packed))
        for j in range(1, fold):
            # Running ">= slot start" overwrite: the highest started slot wins.
            seg_per_lane = jnp.where(lane >= j * e, seg_ref[:, j:j + 1], seg_per_lane)
        out = jnp.where(seg_per_lane == 0, t0, jnp.where(seg_per_lane == 1, t1, t2))

    out_ref[...] = out.astype(out_ref.dtype)


def segment_embedding(segment, table, out_dtype=None):
    """segment: (B, S) int, table: (3, E) float -> (B, S, E) float."""
    B, S = segment.shape
    seg_num, E = table.shape
    N = B * S
    dtype = jnp.dtype(out_dtype) if out_dtype is not None else table.dtype
    itemsize = jnp.dtype(dtype).itemsize

    # Lane-dense packing factor: FOLD consecutive tokens per stored row so the
    # stored last dim FOLD*E is a multiple of 128.  Only used when it divides N
    # cleanly so the final reshape needs no major-axis slice.
    fold = 1 if E % 128 == 0 else 128 // math.gcd(E, 128)
    if N % fold != 0:
        fold = 1  # rare/small case: accept masked partial-lane stores instead of a slice
    e_packed = fold * E
    rows = N // fold  # exact: packed output rows

    # Tile rows: target ~8 MiB of output per grid step (double-buffered 16 MiB
    # + ids + table stays well inside the 64 MiB-per-TC VMEM budget on v7x and
    # is trivial on v5e/v6e), multiple of 8 sublanes.
    target_bytes = 8 * 1024 * 1024
    tile_r = max(8, (target_bytes // (e_packed * itemsize)) // 8 * 8)
    if tile_r >= rows:
        tile_r = rows          # single block == full array (allowed even if rows % 8 != 0)
        num_tiles = 1
    else:
        num_tiles = pl.cdiv(rows, tile_r)

    # Pad only the tiny int32 ids so every ids block is fully in bounds; the
    # output keeps its exact shape and Pallas masks the partial last block.
    seg_flat = segment.reshape(N).astype(jnp.int32)
    ids_rows = num_tiles * tile_r
    if ids_rows * fold != N:
        seg_flat = jnp.pad(seg_flat, (0, ids_rows * fold - N))
    seg_packed = seg_flat.reshape(ids_rows, fold)

    # Tiny table (a few KB); cast to the requested output dtype and tile it
    # along lanes to match the packed layout.
    table_c = table.astype(dtype)
    table_tiled = jnp.tile(table_c, (1, fold)) if fold > 1 else table_c

    # Scoped-VMEM budget: double-buffered output + double-buffered ids block
    # (1-lane-wide blocks pad to 128 lanes in VMEM) + table (padded to 8 rows)
    # + slack.  Kept within v7x's 64 MiB-per-TC physical VMEM.
    out_tile_bytes = tile_r * e_packed * itemsize
    ids_tile_bytes = ((tile_r + 7) // 8) * 8 * 128 * 4
    table_bytes = 8 * e_packed * itemsize
    vmem_limit = 2 * out_tile_bytes + 2 * ids_tile_bytes + table_bytes + (4 << 20)
    vmem_limit = min(max(vmem_limit, 32 << 20), 56 << 20)

    out_packed = pl.pallas_call(
        _segment_embedding_kernel,
        out_shape=jax.ShapeDtypeStruct((rows, e_packed), dtype),
        grid=(num_tiles,),
        in_specs=[
            # Segment ids: one (TILE_R, FOLD) block per grid step (always in bounds).
            pl.BlockSpec((tile_r, fold), lambda i: (i, 0)),
            # Table: constant block index -> DMA'd once, VMEM-resident for all tiles.
            pl.BlockSpec((seg_num, e_packed), lambda i: (0, 0)),
        ],
        out_specs=pl.BlockSpec((tile_r, e_packed), lambda i: (i, 0)),
        compiler_params=pltpu.CompilerParams(
            dimension_semantics=("parallel",),  # shard the tile loop across TCs on v7x
            vmem_limit_bytes=vmem_limit,
        ),
    )(seg_packed, table_tiled)

    # Free reshapes only (no slice): (rows, FOLD*E) -> (N, E) -> (B, S, E).
    return out_packed.reshape(N, E).reshape(B, S, E)


if __name__ == "__main__":
    key = jax.random.PRNGKey(0)
    k_table, k_seg = jax.random.split(key)

    B, S, E = 2, 8, 32
    SEGMENT_NUM = 3

    # Deterministic "nn.Embedding(3, E)" weight (normal init, like PyTorch default N(0,1)).
    table = jax.random.normal(k_table, (SEGMENT_NUM, E), dtype=jnp.float32)
    # Segment ids in {0, 1, 2}.
    segment = jax.random.randint(k_seg, (B, S), 0, SEGMENT_NUM, dtype=jnp.int32)

    out = segment_embedding(segment, table)
    out = jax.block_until_ready(out)

    # Reference check: plain JAX gather.
    ref = table[segment]
    assert out.shape == (B, S, E)
    assert jnp.allclose(out, ref), "mismatch vs reference embedding lookup"

    print("KERNEL_OK")
</pallas_src>

<mosaic_0001>
module attributes {stable_mosaic.version = 11 : i64} {
  func.func @_segment_embedding_kernel(%arg0: i32, %arg1: memref<4x4xi32, #tpu.memory_space<vmem>>, %arg2: memref<3x128xf32, #tpu.memory_space<vmem>>, %arg3: memref<4x128xf32, #tpu.memory_space<vmem>>) attributes {dimension_semantics = [#tpu.dimension_semantics<parallel>], iteration_bounds = array<i64: 1>, scalar_prefetch = 0 : i64, scratch_operands = 0 : i64, tpu.core_type = #tpu.core_type<tc>, window_params = [{transform_indices = @transform_0, window_bounds = array<i64: 4, 4>}, {pipeline_mode = #tpu.pipeline_mode<synchronous>, transform_indices = @transform_1, window_bounds = array<i64: 3, 128>}, {transform_indices = @transform_2, window_bounds = array<i64: 4, 128>}]} {
    %c0 = arith.constant 0 : index
    %c0_0 = arith.constant 0 : index
    %0 = vector.load %arg2[%c0, %c0_0] : memref<3x128xf32, #tpu.memory_space<vmem>>, vector<1x128xf32>
    %c1 = arith.constant 1 : index
    %c0_1 = arith.constant 0 : index
    %1 = vector.load %arg2[%c1, %c0_1] : memref<3x128xf32, #tpu.memory_space<vmem>>, vector<1x128xf32>
    %c2 = arith.constant 2 : index
    %c0_2 = arith.constant 0 : index
    %2 = vector.load %arg2[%c2, %c0_2] : memref<3x128xf32, #tpu.memory_space<vmem>>, vector<1x128xf32>
    %3 = tpu.iota {dimensions = array<i32: 1>} : vector<4x128xi32>
    %c0_3 = arith.constant 0 : index
    %c0_4 = arith.constant 0 : index
    %4 = vector.load %arg1[%c0_3, %c0_4] : memref<4x4xi32, #tpu.memory_space<vmem>>, vector<4x1xi32>
    %5 = vector.shape_cast %4 : vector<4x1xi32> to vector<4x1xi32>
    %6 = vector.broadcast %5 : vector<4x1xi32> to vector<4x128xi32>
    %c32_i32 = arith.constant 32 : i32
    %7 = vector.broadcast %c32_i32 : i32 to vector<4x128xi32>
    %8 = arith.cmpi sge, %3, %7 : vector<4x128xi32>
    %c0_5 = arith.constant 0 : index
    %c1_6 = arith.constant 1 : index
    %9 = vector.load %arg1[%c0_5, %c1_6] : memref<4x4xi32, #tpu.memory_space<vmem>>, vector<4x1xi32>
    %10 = vector.shape_cast %9 : vector<4x1xi32> to vector<4x1xi32>
    %11 = vector.broadcast %10 : vector<4x1xi32> to vector<4x128xi32>
    %12 = arith.select %8, %11, %6 : vector<4x128xi1>, vector<4x128xi32>
    %c64_i32 = arith.constant 64 : i32
    %13 = vector.broadcast %c64_i32 : i32 to vector<4x128xi32>
    %14 = arith.cmpi sge, %3, %13 : vector<4x128xi32>
    %c0_7 = arith.constant 0 : index
    %c2_8 = arith.constant 2 : index
    %15 = vector.load %arg1[%c0_7, %c2_8] : memref<4x4xi32, #tpu.memory_space<vmem>>, vector<4x1xi32>
    %16 = vector.shape_cast %15 : vector<4x1xi32> to vector<4x1xi32>
    %17 = vector.broadcast %16 : vector<4x1xi32> to vector<4x128xi32>
    %18 = arith.select %14, %17, %12 : vector<4x128xi1>, vector<4x128xi32>
    %c96_i32 = arith.constant 96 : i32
    %19 = vector.broadcast %c96_i32 : i32 to vector<4x128xi32>
    %20 = arith.cmpi sge, %3, %19 : vector<4x128xi32>
    %c0_9 = arith.constant 0 : index
    %c3 = arith.constant 3 : index
    %21 = vector.load %arg1[%c0_9, %c3] : memref<4x4xi32, #tpu.memory_space<vmem>>, vector<4x1xi32>
    %22 = vector.shape_cast %21 : vector<4x1xi32> to vector<4x1xi32>
    %23 = vector.broadcast %22 : vector<4x1xi32> to vector<4x128xi32>
    %24 = arith.select %20, %23, %18 : vector<4x128xi1>, vector<4x128xi32>
    %c0_i32 = arith.constant 0 : i32
    %25 = vector.broadcast %c0_i32 : i32 to vector<4x128xi32>
    %26 = arith.cmpi eq, %24, %25 : vector<4x128xi32>
    %c1_i32 = arith.constant 1 : i32
    %27 = vector.broadcast %c1_i32 : i32 to vector<4x128xi32>
    %28 = arith.cmpi eq, %24, %27 : vector<4x128xi32>
    %29 = vector.shape_cast %1 : vector<1x128xf32> to vector<1x128xf32>
    %30 = vector.broadcast %29 : vector<1x128xf32> to vector<4x128xf32>
    %31 = vector.shape_cast %2 : vector<1x128xf32> to vector<1x128xf32>
    %32 = vector.broadcast %31 : vector<1x128xf32> to vector<4x128xf32>
    %33 = arith.select %28, %30, %32 : vector<4x128xi1>, vector<4x128xf32>
    %34 = vector.shape_cast %0 : vector<1x128xf32> to vector<1x128xf32>
    %35 = vector.broadcast %34 : vector<1x128xf32> to vector<4x128xf32>
    %36 = arith.select %26, %35, %33 : vector<4x128xi1>, vector<4x128xf32>
    %c0_10 = arith.constant 0 : index
    %c0_11 = arith.constant 0 : index
    %37 = vector.load %arg3[%c0_10, %c0_11] : memref<4x128xf32, #tpu.memory_space<vmem>>, vector<4x128xf32>
    tpu.vector_store %arg3[%c0_10, %c0_11], %36 {strides = array<i32>} : memref<4x128xf32, #tpu.memory_space<vmem>>, vector<4x128xf32>,
    return
  }
  func.func @transform_0(%arg0: i32) -> (i32, i32) {
    %c0_i32 = arith.constant 0 : i32
    %c0_i32_0 = arith.constant 0 : i32
    return %arg0, %c0_i32 : i32, i32
  }
  func.func @transform_1(%arg0: i32) -> (i32, i32) {
    %c0_i32 = arith.constant 0 : i32
    %c0_i32_0 = arith.constant 0 : i32
    %c0_i32_1 = arith.constant 0 : i32
    return %c0_i32, %c0_i32_0 : i32, i32
  }
  func.func @transform_2(%arg0: i32) -> (i32, i32) {
    %c0_i32 = arith.constant 0 : i32
    %c0_i32_0 = arith.constant 0 : i32
    return %arg0, %c0_i32 : i32, i32
  }
}

</mosaic_0001>

<llo_original>
// kernel: tpu_custom_call.1
$region0: #{tpu_custom_call.1}
  #allocation0 [shape = 'u32[]', space=smem, size = 0x4, offset = 0x4, fixed_abs, tag = 'smem constant byte address 0x4 - core index']
  #allocation1 [shape = 'u32[144,128]{1,0:T(1,128)}', space=vmem, size = 0x12000, scoped, tag = 'internal scratch']
  %s0 = inlined_call_operand.hbm [shape: s32[4,4], index: 0, kind: input, shape index: {}]
  %s1 = inlined_call_operand.hbm [shape: f32[3,128], index: 1, kind: input, shape index: {}]
  %s2 = inlined_call_operand.hbm [shape: f32[4,128], index: 2, kind: output, shape index: {}]
  %s3 = sld [smem:[#allocation0]]
  $region26: #{tpu_custom_call.1} parent=0
    _
  %s5 = ssub.s32 1, %s3
  %s6 = scalar_select 0, %s5, %s3
  $region1: #{tpu_custom_call.1} parent=0
    #allocation2 [shape = 'u8[2048]{0}', space=vmem, size = 0x800, scoped, tag = 'input window, operand 0, single buffered']
    #allocation3 [shape = 's32[1]{0}', space=sflag, size = 0x4, scoped, tag = 'scoped memory for tpu_custom_call.1']
    #allocation4 [shape = 's32[1]{0}', space=sflag, size = 0x4, scoped, tag = 'scoped memory for tpu_custom_call.1']
    #allocation5 [shape = 'u8[2048]{0}', space=vmem, size = 0x800, scoped, tag = 'input window, operand 1, single buffered']
    #allocation6 [shape = 's32[1]{0}', space=sflag, size = 0x4, scoped, tag = 'scoped memory for tpu_custom_call.1']
    #allocation7 [shape = 'u8[2048]{0}', space=vmem, size = 0x800, scoped, tag = 'output window, operand 0, single buffered']
    %7 = vsyncpa [#allocation3], 0
    %8 = vsyncpa [#allocation6], 0
    %9 = vsyncpa [#allocation4], 0
    // Predicated region
    $region2: #{tpu_custom_call.1} parent=1 // pred_check
      _
    $region3: #{tpu_custom_call.1} parent=1 // pred_check_branch
      %11 = sbr.rel (0) target = $region5
    $region4: #{tpu_custom_call.1} parent=1 // pred_region
      %s13 = ssub.s32 64, 64
      %14 = vsyncadd [#allocation3], %s13
      %s16 = sshll.u32 [#allocation2], 4
      %s17 = int_to_ptr.vmem [resolvable:$true] %s16
      %19 = dma.hbm_to_vmem [thread:$0]  %s0, 64, %s17, [#allocation3]
    $region5: #{tpu_custom_call.1} parent=1 // pred_fallthru
      _
    // Predicated region
    $region6: #{tpu_custom_call.1} parent=1 // pred_check
      _
    $region7: #{tpu_custom_call.1} parent=1 // pred_check_branch
      %21 = sbr.rel (0) target = $region9
    $region8: #{tpu_custom_call.1} parent=1 // pred_region
      %s23 = ssub.s32 64, 64
      %24 = vsyncadd [#allocation6], %s23
      %s26 = sshll.u32 [#allocation5], 4
      %s27 = int_to_ptr.vmem [resolvable:$true] %s26
      %29 = dma.hbm_to_vmem [thread:$0]  %s1, 64, %s27, [#allocation6]
    $region9: #{tpu_custom_call.1} parent=1 // pred_fallthru
      _
    // Predicated region
    $region10: #{tpu_custom_call.1} parent=1 // pred_check
      _
    $region11: #{tpu_custom_call.1} parent=1 // pred_check_branch
      %31 = sbr.rel (0) target = $region13
    $region12: #{tpu_custom_call.1} parent=1 // pred_region
      %32 = dma.done [#allocation3], 64
    $region13: #{tpu_custom_call.1} parent=1 // pred_fallthru
      _
    // Predicated region
    $region14: #{tpu_custom_call.1} parent=1 // pred_check
      _
    $region15: #{tpu_custom_call.1} parent=1 // pred_check_branch
      %34 = sbr.rel (0) target = $region17
    $region16: #{tpu_custom_call.1} parent=1 // pred_region
      %35 = dma.done [#allocation6], 64
    $region17: #{tpu_custom_call.1} parent=1 // pred_fallthru
      _
    %v36 = vld [vmem:[#allocation5] sm:$0x1]
    %v37 = vld [vmem:[#allocation5 + $0x1] sm:$0x1]
    %v38 = vld [vmem:[#allocation5 + $0x2] sm:$0x1]
    %v39 = vlaneseq
    %v40 = vand.u32 %v39, 127
    %v41 = vld [vmem:[#allocation2] sm:$0xf]
    %42 = vset.pattern.permute.xlu0 0
    %43 = vperm.xlu0 %42, %v41
    %v44 = vpop.permute.xlu0 %43
    %vm45 = vcmp.ge.s32.totalorder %v40, 32
    %46 = vset.pattern.permute.xlu0 1
    %47 = vperm.xlu0 %46, %v41
    %v48 = vpop.permute.xlu0 %47
    %v49 = vsel %vm45, %v48, %v44
    %vm50 = vcmp.ge.s32.totalorder %v40, 64
    %51 = vset.pattern.permute.xlu0 2
    %52 = vperm.xlu0 %51, %v41
    %v53 = vpop.permute.xlu0 %52
    %v54 = vsel %vm50, %v53, %v49
    %vm55 = vcmp.ge.s32.totalorder %v40, 96
    %56 = vset.pattern.permute.xlu0 3
    %57 = vperm.xlu0 %56, %v41
    %v58 = vpop.permute.xlu0 %57
    %v59 = vsel %vm55, %v58, %v54
    %vm60 = vcmp.eq.s32.totalorder %v59, 0
    %vm61 = vcmp.eq.s32.totalorder %v59, 1
    %v62 = vlaneseq
    %v63 = vshrl.u32 %v62, 7
    %v64 = vsub.s32 0, %v63
    %v65 = vrot.slane %v37, %v64
    %v66 = vlaneseq
    %v67 = vshrl.u32 %v66, 7
    %v68 = vsub.s32 0, %v67
    %v69 = vrot.slane %v38, %v68
    %v70 = vsel %vm61, %v65, %v69
    %v71 = vlaneseq
    %v72 = vshrl.u32 %v71, 7
    %v73 = vsub.s32 0, %v72
    %v74 = vrot.slane %v36, %v73
    %v75 = vsel %vm60, %v74, %v70
    %76 = vst [vmem:[#allocation7] sm:$0xf] %v75
    // Predicated region
    $region18: #{tpu_custom_call.1} parent=1 // pred_check
      _
    $region19: #{tpu_custom_call.1} parent=1 // pred_check_branch
      %78 = sbr.rel (0) target = $region21
    $region20: #{tpu_custom_call.1} parent=1 // pred_region
      %s80 = ssub.s32 64, 64
      %81 = vsyncadd [#allocation4], %s80
      %s83 = sshll.u32 [#allocation7], 4
      %s84 = int_to_ptr.vmem [resolvable:$true] %s83
      %86 = dma.vmem_to_hbm [thread:$0]  %s84, 64, %s2, [#allocation4]
    $region21: #{tpu_custom_call.1} parent=1 // pred_fallthru
      _
    // Predicated region
    $region22: #{tpu_custom_call.1} parent=1 // pred_check
      _
    $region23: #{tpu_custom_call.1} parent=1 // pred_check_branch
      %88 = sbr.rel (0) target = $region25
    $region24: #{tpu_custom_call.1} parent=1 // pred_region
      %89 = dma.done [#allocation4], 64
    $region25: #{tpu_custom_call.1} parent=1 // pred_fallthru
      _
    %90 = vsyncpa [#allocation3], 1
    %91 = vsyncpa [#allocation6], 1
    %92 = vsyncpa [#allocation4], 1

</llo_original>
